<compile_context>
chip_gen: v7x
topology: tpu7x:2x2x1
jax: 0.10.0
libtpu: 0.0.40
codegen_flags: <defaults>
</compile_context>

<pallas_src>
import jax
import jax.numpy as jnp
from jax.experimental import pallas as pl
from jax.experimental.pallas import tpu as pltpu


def _softplus_torch(z):
    # Matches torch.nn.Softplus(beta=1, threshold=20): linear above threshold.
    safe_z = jnp.where(z > 20.0, 0.0, z)
    return jnp.where(z > 20.0, z, jnp.log1p(jnp.exp(safe_z)))


def _make_kernel(dim, n0, n1, compute_dtype):
    small_k = dim <= 8  # K too small to be worth an MXU pass + result-FIFO pop

    def kernel(xT_ref, w1_ref, b1_ref, w2_ref, b2_ref, w3_ref, b3_ref, oT_ref):
        xT = xT_ref[...]                      # (dim, TB)   batch on lanes
        w1 = w1_ref[...]                      # (n0, dim)

        if small_k:
            # Layer 1: unrolled rank-1 broadcast multiply-adds on the VPU.
            z1 = (w1[:, 0:1].astype(jnp.float32)
                  * xT[0:1, :].astype(jnp.float32))
            for k in range(1, dim):
                z1 = z1 + (w1[:, k:k + 1].astype(jnp.float32)
                           * xT[k:k + 1, :].astype(jnp.float32))
        else:
            z1 = jnp.dot(w1, xT, preferred_element_type=jnp.float32)
        z1 = z1 + b1_ref[...]                 # (n0, TB) f32
        h1 = jnp.tanh(z1.astype(compute_dtype))          # lane-dense tanh

        z2 = (jnp.dot(w2_ref[...], h1, preferred_element_type=jnp.float32)
              + b2_ref[...])
        h2 = jnp.tanh(z2.astype(compute_dtype))          # (n1, TB)

        z3 = (jnp.dot(w3_ref[...], h2, preferred_element_type=jnp.float32)
              + b3_ref[...])
        # Softplus in f32; lane-dense (1, TB) unmasked store.
        oT_ref[...] = _softplus_torch(z3.astype(jnp.float32)).astype(oT_ref.dtype)

    return kernel


def basicnet_forward(x, params, *, block_batch=1024, compute_dtype=jnp.float32):
    """x: (..., dim) float32. params: PyTorch-layout weights/biases (see init)."""
    assert x.ndim >= 2, f"{x.shape} needs to be 2D. E.g., (batch_size, dim)"
    lead = x.shape[:-1]
    dim = x.shape[-1]
    x2 = x.reshape(-1, dim)
    batch = x2.shape[0]

    w1, b1 = params["w1"], params["b1"]
    w2, b2 = params["w2"], params["b2"]
    w3, b3 = params["w3"], params["b3"]
    n0, n1 = w1.shape[0], w2.shape[0]

    # Lane-dense layout: batch on the last (lane) axis.
    xT = x2.T.astype(compute_dtype)                       # (dim, batch)
    if batch <= block_batch:
        tb = batch                                        # single block, full extent
        padded = batch
    else:
        assert block_batch % 128 == 0
        tb = block_batch
        padded = pl.cdiv(batch, tb) * tb
        if padded != batch:
            xT = jnp.pad(xT, ((0, 0), (0, padded - batch)))
    nb = padded // tb

    wbytes = jnp.dtype(compute_dtype).itemsize
    cost = pl.CostEstimate(
        flops=2 * batch * (dim * n0 + n0 * n1 + n1),
        transcendentals=batch * (n0 + n1 + 1),
        bytes_accessed=(padded * dim * wbytes + padded * 4
                        + (w1.size + w2.size + w3.size) * wbytes
                        + (b1.size + b2.size + b3.size) * 4),
    )

    out_t = pl.pallas_call(
        _make_kernel(dim, n0, n1, compute_dtype),
        out_shape=jax.ShapeDtypeStruct((1, padded), jnp.float32),
        grid=(nb,),
        in_specs=[
            pl.BlockSpec((dim, tb), lambda i: (0, i)),    # xT streams over batch
            pl.BlockSpec((n0, dim), lambda i: (0, 0)),    # weights/biases resident
            pl.BlockSpec((n0, 1), lambda i: (0, 0)),
            pl.BlockSpec((n1, n0), lambda i: (0, 0)),
            pl.BlockSpec((n1, 1), lambda i: (0, 0)),
            pl.BlockSpec((1, n1), lambda i: (0, 0)),
            pl.BlockSpec((1, 1), lambda i: (0, 0)),
        ],
        out_specs=pl.BlockSpec((1, tb), lambda i: (0, i)),
        compiler_params=pltpu.CompilerParams(
            dimension_semantics=("parallel",)),
        cost_estimate=cost,
    )(xT,
      w1.astype(compute_dtype), b1.astype(jnp.float32),
      w2.astype(compute_dtype), b2.astype(jnp.float32),
      w3.astype(compute_dtype), b3.astype(jnp.float32))

    # (1, padded) lane-dense slab -> (..., 1), dropping any padded rows.
    return out_t[0, :batch].reshape(lead + (1,))


def init_params(key, dim, neurons):
    """PyTorch nn.Linear-style init; weights (out, in), biases (out, 1)."""
    n0, n1 = neurons
    keys = jax.random.split(key, 6)

    def lin(kw, kb, fan_in, fan_out):
        bound = 1.0 / (fan_in ** 0.5)
        w = jax.random.uniform(kw, (fan_out, fan_in), jnp.float32, -bound, bound)
        b = jax.random.uniform(kb, (fan_out, 1), jnp.float32, -bound, bound)
        return w, b

    w1, b1 = lin(keys[0], keys[1], dim, n0)
    w2, b2 = lin(keys[2], keys[3], n0, n1)
    w3, b3 = lin(keys[4], keys[5], n1, 1)
    return {"w1": w1, "b1": b1, "w2": w2, "b2": b2, "w3": w3, "b3": b3}


def reference_forward(x, params):
    h1 = jnp.tanh(x @ params["w1"].T + params["b1"].T)
    h2 = jnp.tanh(h1 @ params["w2"].T + params["b2"].T)
    z = h2 @ params["w3"].T + params["b3"].T
    return _softplus_torch(z)


if __name__ == "__main__":
    dim = 4
    neurons = (32, 32)

    key = jax.random.PRNGKey(0)
    k_params, k_x1, k_x2 = jax.random.split(key, 3)
    params = init_params(k_params, dim, neurons)

    # 1) Small-shape check (single block, TB == batch).
    batch = 8
    x = jax.random.normal(k_x1, (batch, dim), dtype=jnp.float32)
    out = jax.block_until_ready(basicnet_forward(x, params))
    ref = reference_forward(x, params)
    assert out.shape == (batch, 1)
    assert jnp.allclose(out, ref, atol=1e-5, rtol=1e-5), "small-batch mismatch"

    # 2) Larger batch exercising the pipelined batch grid + padding path
    #    (TB=1024 -> padded to 3072, grid=(3,), resident weights).
    batch2 = 2560
    x2 = jax.random.normal(k_x2, (batch2, dim), dtype=jnp.float32)
    out2 = jax.block_until_ready(basicnet_forward(x2, params, block_batch=1024))
    ref2 = reference_forward(x2, params)
    assert out2.shape == (batch2, 1)
    assert jnp.allclose(out2, ref2, atol=1e-5, rtol=1e-5), "tiled-batch mismatch"

    # 3) bf16-activation path (v6e/v7x EUP/VPU lever); f32 matmul accumulation.
    out_bf16 = jax.block_until_ready(
        basicnet_forward(x2, params, block_batch=1024,
                         compute_dtype=jnp.bfloat16))
    assert out_bf16.shape == (batch2, 1)
    assert jnp.allclose(out_bf16, ref2, atol=5e-2, rtol=5e-2), "bf16 path mismatch"

    print("KERNEL_OK")
</pallas_src>

<mosaic_0001>
module attributes {stable_mosaic.version = 11 : i64} {
  func.func @kernel(%arg0: i32, %arg1: memref<4x8xf32, #tpu.memory_space<vmem>>, %arg2: memref<32x4xf32, #tpu.memory_space<vmem>>, %arg3: memref<32x1xf32, #tpu.memory_space<vmem>>, %arg4: memref<32x32xf32, #tpu.memory_space<vmem>>, %arg5: memref<32x1xf32, #tpu.memory_space<vmem>>, %arg6: memref<1x32xf32, #tpu.memory_space<vmem>>, %arg7: memref<1x1xf32, #tpu.memory_space<vmem>>, %arg8: memref<1x8xf32, #tpu.memory_space<vmem>>) attributes {dimension_semantics = [#tpu.dimension_semantics<parallel>], iteration_bounds = array<i64: 1>, scalar_prefetch = 0 : i64, scratch_operands = 0 : i64, tpu.core_type = #tpu.core_type<tc>, window_params = [{transform_indices = @transform_0, window_bounds = array<i64: 4, 8>}, {pipeline_mode = #tpu.pipeline_mode<synchronous>, transform_indices = @transform_1, window_bounds = array<i64: 32, 4>}, {pipeline_mode = #tpu.pipeline_mode<synchronous>, transform_indices = @transform_2, window_bounds = array<i64: 32, 1>}, {pipeline_mode = #tpu.pipeline_mode<synchronous>, transform_indices = @transform_3, window_bounds = array<i64: 32, 32>}, {pipeline_mode = #tpu.pipeline_mode<synchronous>, transform_indices = @transform_4, window_bounds = array<i64: 32, 1>}, {pipeline_mode = #tpu.pipeline_mode<synchronous>, transform_indices = @transform_5, window_bounds = array<i64: 1, 32>}, {pipeline_mode = #tpu.pipeline_mode<synchronous>, transform_indices = @transform_6, window_bounds = array<i64: 1, 1>}, {transform_indices = @transform_7, window_bounds = array<i64: 1, 8>}]} {
    %c0 = arith.constant 0 : index
    %c0_0 = arith.constant 0 : index
    %0 = vector.load %arg1[%c0, %c0_0] : memref<4x8xf32, #tpu.memory_space<vmem>>, vector<4x8xf32>
    %c0_1 = arith.constant 0 : index
    %c0_2 = arith.constant 0 : index
    %1 = vector.load %arg2[%c0_1, %c0_2] : memref<32x4xf32, #tpu.memory_space<vmem>>, vector<32x4xf32>
    %2 = vector.extract_strided_slice %1 {offsets = [0, 0], sizes = [32, 1], strides = [1, 1]} : vector<32x4xf32> to vector<32x1xf32>
    %3 = vector.extract_strided_slice %0 {offsets = [0, 0], sizes = [1, 8], strides = [1, 1]} : vector<4x8xf32> to vector<1x8xf32>
    %4 = vector.broadcast %2 : vector<32x1xf32> to vector<32x8xf32>
    %5 = vector.broadcast %3 : vector<1x8xf32> to vector<32x8xf32>
    %6 = arith.mulf %4, %5 : vector<32x8xf32>
    %7 = vector.extract_strided_slice %1 {offsets = [0, 1], sizes = [32, 1], strides = [1, 1]} : vector<32x4xf32> to vector<32x1xf32>
    %8 = vector.extract_strided_slice %0 {offsets = [1, 0], sizes = [1, 8], strides = [1, 1]} : vector<4x8xf32> to vector<1x8xf32>
    %9 = vector.broadcast %7 : vector<32x1xf32> to vector<32x8xf32>
    %10 = vector.broadcast %8 : vector<1x8xf32> to vector<32x8xf32>
    %11 = arith.mulf %9, %10 : vector<32x8xf32>
    %12 = arith.addf %6, %11 : vector<32x8xf32>
    %13 = vector.extract_strided_slice %1 {offsets = [0, 2], sizes = [32, 1], strides = [1, 1]} : vector<32x4xf32> to vector<32x1xf32>
    %14 = vector.extract_strided_slice %0 {offsets = [2, 0], sizes = [1, 8], strides = [1, 1]} : vector<4x8xf32> to vector<1x8xf32>
    %15 = vector.broadcast %13 : vector<32x1xf32> to vector<32x8xf32>
    %16 = vector.broadcast %14 : vector<1x8xf32> to vector<32x8xf32>
    %17 = arith.mulf %15, %16 : vector<32x8xf32>
    %18 = arith.addf %12, %17 : vector<32x8xf32>
    %19 = vector.extract_strided_slice %1 {offsets = [0, 3], sizes = [32, 1], strides = [1, 1]} : vector<32x4xf32> to vector<32x1xf32>
    %20 = vector.extract_strided_slice %0 {offsets = [3, 0], sizes = [1, 8], strides = [1, 1]} : vector<4x8xf32> to vector<1x8xf32>
    %21 = vector.broadcast %19 : vector<32x1xf32> to vector<32x8xf32>
    %22 = vector.broadcast %20 : vector<1x8xf32> to vector<32x8xf32>
    %23 = arith.mulf %21, %22 : vector<32x8xf32>
    %24 = arith.addf %18, %23 : vector<32x8xf32>
    %c0_3 = arith.constant 0 : index
    %c0_4 = arith.constant 0 : index
    %25 = vector.load %arg3[%c0_3, %c0_4] : memref<32x1xf32, #tpu.memory_space<vmem>>, vector<32x1xf32>
    %26 = vector.broadcast %25 : vector<32x1xf32> to vector<32x8xf32>
    %27 = arith.addf %24, %26 : vector<32x8xf32>
    %28 = math.tanh %27 : vector<32x8xf32>
    %c0_5 = arith.constant 0 : index
    %c0_6 = arith.constant 0 : index
    %29 = vector.load %arg4[%c0_5, %c0_6] : memref<32x32xf32, #tpu.memory_space<vmem>>, vector<32x32xf32>
    %cst = arith.constant dense<0.000000e+00> : vector<32x8xf32>
    %30 = tpu.matmul %29, %28, %cst {dimension_numbers = #tpu.dot_dimension_numbers<[1], [0], [0], [1], [0, 0, 1, 1], [], []>} : vector<32x32xf32>, vector<32x8xf32>, vector<32x8xf32> -> vector<32x8xf32>
    %c0_7 = arith.constant 0 : index
    %c0_8 = arith.constant 0 : index
    %31 = vector.load %arg5[%c0_7, %c0_8] : memref<32x1xf32, #tpu.memory_space<vmem>>, vector<32x1xf32>
    %32 = vector.broadcast %31 : vector<32x1xf32> to vector<32x8xf32>
    %33 = arith.addf %30, %32 : vector<32x8xf32>
    %34 = math.tanh %33 : vector<32x8xf32>
    %c0_9 = arith.constant 0 : index
    %c0_10 = arith.constant 0 : index
    %35 = vector.load %arg6[%c0_9, %c0_10] : memref<1x32xf32, #tpu.memory_space<vmem>>, vector<1x32xf32>
    %cst_11 = arith.constant dense<0.000000e+00> : vector<1x8xf32>
    %36 = tpu.matmul %35, %34, %cst_11 {dimension_numbers = #tpu.dot_dimension_numbers<[1], [0], [0], [1], [0, 0, 1, 1], [], []>} : vector<1x32xf32>, vector<32x8xf32>, vector<1x8xf32> -> vector<1x8xf32>
    %c0_12 = arith.constant 0 : index
    %c0_13 = arith.constant 0 : index
    %37 = vector.load %arg7[%c0_12, %c0_13] : memref<1x1xf32, #tpu.memory_space<vmem>>, vector<1x1xf32>
    %38 = vector.broadcast %37 : vector<1x1xf32> to vector<1x8xf32>
    %39 = arith.addf %36, %38 : vector<1x8xf32>
    %cst_14 = arith.constant 2.000000e+01 : f32
    %40 = vector.broadcast %cst_14 : f32 to vector<1x8xf32>
    %41 = arith.cmpf ogt, %39, %40 : vector<1x8xf32>
    %cst_15 = arith.constant 0.000000e+00 : f32
    %42 = vector.broadcast %cst_15 : f32 to vector<1x8xf32>
    %43 = arith.select %41, %42, %39 : vector<1x8xi1>, vector<1x8xf32>
    %cst_16 = arith.constant 2.000000e+01 : f32
    %44 = vector.broadcast %cst_16 : f32 to vector<1x8xf32>
    %45 = arith.cmpf ogt, %39, %44 : vector<1x8xf32>
    %46 = math.exp %43 : vector<1x8xf32>
    %47 = math.log1p %46 : vector<1x8xf32>
    %48 = arith.select %45, %39, %47 : vector<1x8xi1>, vector<1x8xf32>
    %c0_17 = arith.constant 0 : index
    %c0_18 = arith.constant 0 : index
    %49 = vector.load %arg8[%c0_17, %c0_18] : memref<1x8xf32, #tpu.memory_space<vmem>>, vector<1x8xf32>
    tpu.vector_store %arg8[%c0_17, %c0_18], %48 {strides = array<i32>} : memref<1x8xf32, #tpu.memory_space<vmem>>, vector<1x8xf32>,
    return
  }
  func.func @transform_0(%arg0: i32) -> (i32, i32) {
    %c0_i32 = arith.constant 0 : i32
    %c0_i32_0 = arith.constant 0 : i32
    return %c0_i32, %arg0 : i32, i32
  }
  func.func @transform_1(%arg0: i32) -> (i32, i32) {
    %c0_i32 = arith.constant 0 : i32
    %c0_i32_0 = arith.constant 0 : i32
    %c0_i32_1 = arith.constant 0 : i32
    return %c0_i32, %c0_i32_0 : i32, i32
  }
  func.func @transform_2(%arg0: i32) -> (i32, i32) {
    %c0_i32 = arith.constant 0 : i32
    %c0_i32_0 = arith.constant 0 : i32
    %c0_i32_1 = arith.constant 0 : i32
    return %c0_i32, %c0_i32_0 : i32, i32
  }
  func.func @transform_3(%arg0: i32) -> (i32, i32) {
    %c0_i32 = arith.constant 0 : i32
    %c0_i32_0 = arith.constant 0 : i32
    %c0_i32_1 = arith.constant 0 : i32
    return %c0_i32, %c0_i32_0 : i32, i32
  }
  func.func @transform_4(%arg0: i32) -> (i32, i32) {
    %c0_i32 = arith.constant 0 : i32
    %c0_i32_0 = arith.constant 0 : i32
    %c0_i32_1 = arith.constant 0 : i32
    return %c0_i32, %c0_i32_0 : i32, i32
  }
  func.func @transform_5(%arg0: i32) -> (i32, i32) {
    %c0_i32 = arith.constant 0 : i32
    %c0_i32_0 = arith.constant 0 : i32
    %c0_i32_1 = arith.constant 0 : i32
    return %c0_i32, %c0_i32_0 : i32, i32
  }
  func.func @transform_6(%arg0: i32) -> (i32, i32) {
    %c0_i32 = arith.constant 0 : i32
    %c0_i32_0 = arith.constant 0 : i32
    %c0_i32_1 = arith.constant 0 : i32
    return %c0_i32, %c0_i32_0 : i32, i32
  }
  func.func @transform_7(%arg0: i32) -> (i32, i32) {
    %c0_i32 = arith.constant 0 : i32
    %c0_i32_0 = arith.constant 0 : i32
    return %c0_i32, %arg0 : i32, i32
  }
}

</mosaic_0001>

<llo_original>
// kernel: tpu_custom_call.1
$region0: #{tpu_custom_call.1}
  #allocation0 [shape = 'u32[]', space=smem, size = 0x4, offset = 0x4, fixed_abs, tag = 'smem constant byte address 0x4 - core index']
  #allocation1 [shape = 'u32[144,128]{1,0:T(1,128)}', space=vmem, size = 0x12000, scoped, tag = 'internal scratch']
  #allocation2 [shape = 'f32[1,1]{1,0:T(1,128)S(1)}', space=vmem, size = 0x200, scoped, tag = 'scoped memory for tpu_custom_call.1']
  %s0 = inlined_call_operand.vmem [shape: f32[4,8], index: 0, kind: input, shape index: {}]
  %s1 = inlined_call_operand.vmem [shape: f32[32,4], index: 1, kind: input, shape index: {}]
  %s2 = inlined_call_operand.vmem [shape: f32[32,1], index: 2, kind: input, shape index: {}]
  %s3 = inlined_call_operand.vmem [shape: f32[32,32], index: 3, kind: input, shape index: {}]
  %s4 = inlined_call_operand.vmem [shape: f32[32,1], index: 4, kind: input, shape index: {}]
  %s5 = inlined_call_operand.vmem [shape: f32[1,32], index: 5, kind: input, shape index: {}]
  %s6 = inlined_call_operand.<no memory space> [shape: f32[1,1], index: 6, kind: input, shape index: {}]
  %s7 = inlined_call_operand.hbm [shape: f32[1,8], index: 7, kind: output, shape index: {}]
  %s8 = sld [smem:[#allocation0]]
  $region38: #{tpu_custom_call.1} parent=0
    _
  %s10 = ssub.s32 1, %s8
  %s11 = scalar_select 0, %s10, %s8
  %v12 = vstv %s6
  %13 = vst [vmem:[#allocation2] sm:$0x1] %v12
  $region1: #{tpu_custom_call.1} parent=0
    #allocation3 [shape = 'u8[512]{0}', space=vmem, size = 0x400, scoped, tag = 'output window, operand 0, single buffered']
    #allocation4 [shape = 's32[1]{0}', space=sflag, size = 0x4, scoped, tag = 'scoped memory for tpu_custom_call.1']
    %14 = vsyncpa [#allocation4], 0
    // Predicated region
    $region2: #{tpu_custom_call.1} parent=1 // pred_check
      _
    $region3: #{tpu_custom_call.1} parent=1 // pred_check_branch
      %16 = sbr.rel (0) target = $region5
    $region4: #{tpu_custom_call.1} parent=1 // pred_region
      _
    $region5: #{tpu_custom_call.1} parent=1 // pred_fallthru
      _
    // Predicated region
    $region6: #{tpu_custom_call.1} parent=1 // pred_check
      _
    $region7: #{tpu_custom_call.1} parent=1 // pred_check_branch
      %18 = sbr.rel (0) target = $region9
    $region8: #{tpu_custom_call.1} parent=1 // pred_region
      _
    $region9: #{tpu_custom_call.1} parent=1 // pred_fallthru
      _
    // Predicated region
    $region10: #{tpu_custom_call.1} parent=1 // pred_check
      _
    $region11: #{tpu_custom_call.1} parent=1 // pred_check_branch
      %20 = sbr.rel (0) target = $region13
    $region12: #{tpu_custom_call.1} parent=1 // pred_region
      _
    $region13: #{tpu_custom_call.1} parent=1 // pred_fallthru
      _
    // Predicated region
    $region14: #{tpu_custom_call.1} parent=1 // pred_check
      _
    $region15: #{tpu_custom_call.1} parent=1 // pred_check_branch
      %22 = sbr.rel (0) target = $region17
    $region16: #{tpu_custom_call.1} parent=1 // pred_region
      _
    $region17: #{tpu_custom_call.1} parent=1 // pred_fallthru
      _
    // Predicated region
    $region18: #{tpu_custom_call.1} parent=1 // pred_check
      _
    $region19: #{tpu_custom_call.1} parent=1 // pred_check_branch
      %24 = sbr.rel (0) target = $region21
    $region20: #{tpu_custom_call.1} parent=1 // pred_region
      _
    $region21: #{tpu_custom_call.1} parent=1 // pred_fallthru
      _
    // Predicated region
    $region22: #{tpu_custom_call.1} parent=1 // pred_check
      _
    $region23: #{tpu_custom_call.1} parent=1 // pred_check_branch
      %26 = sbr.rel (0) target = $region25
    $region24: #{tpu_custom_call.1} parent=1 // pred_region
      _
    $region25: #{tpu_custom_call.1} parent=1 // pred_fallthru
      _
    // Predicated region
    $region26: #{tpu_custom_call.1} parent=1 // pred_check
      _
    $region27: #{tpu_custom_call.1} parent=1 // pred_check_branch
      %28 = sbr.rel (0) target = $region29
    $region28: #{tpu_custom_call.1} parent=1 // pred_region
      _
    $region29: #{tpu_custom_call.1} parent=1 // pred_fallthru
      _
    %v29 = vld [vmem:[%s0] sm:$0xf]
    %v30 = vld [vmem:[%s1] sm:$0xff]
    %v31 = vld [vmem:[%s1 + $0x8] sm:$0xff]
    %v32 = vld [vmem:[%s1 + $0x10] sm:$0xff]
    %v33 = vld [vmem:[%s1 + $0x18] sm:$0xff]
    %35 = vset.pattern.permute.xlu0 0
    %36 = vperm.xlu0 %35, %v30
    %v37 = vpop.permute.xlu0 %36
    %40 = vset.pattern.permute.xlu0 0
    %41 = vperm.xlu0 %40, %v31
    %v42 = vpop.permute.xlu0 %41
    %45 = vset.pattern.permute.xlu0 0
    %46 = vperm.xlu0 %45, %v32
    %v47 = vpop.permute.xlu0 %46
    %50 = vset.pattern.permute.xlu0 0
    %51 = vperm.xlu0 %50, %v33
    %v52 = vpop.permute.xlu0 %51
    %v54 = vlaneseq
    %v55 = vshrl.u32 %v54, 7
    %v56 = vsub.s32 0, %v55
    %v57 = vrot.slane %v29, %v56
    %v58 = vmul.f32 %v37, %v57
    %v59 = vmul.f32 %v42, %v57
    %v60 = vmul.f32 %v47, %v57
    %v61 = vmul.f32 %v52, %v57
    %62 = vset.pattern.permute.xlu0 1
    %63 = vperm.xlu0 %62, %v30
    %v64 = vpop.permute.xlu0 %63
    %66 = vset.pattern.permute.xlu0 1
    %67 = vperm.xlu0 %66, %v31
    %v68 = vpop.permute.xlu0 %67
    %70 = vset.pattern.permute.xlu0 1
    %71 = vperm.xlu0 %70, %v32
    %v72 = vpop.permute.xlu0 %71
    %74 = vset.pattern.permute.xlu0 1
    %75 = vperm.xlu0 %74, %v33
    %v76 = vpop.permute.xlu0 %75
    %v78 = vlaneseq
    %v79 = vshrl.u32 %v78, 7
    %v80 = vsub.s32 1, %v79
    %v81 = vrot.slane %v29, %v80
    %v82 = vmul.f32 %v64, %v81
    %v83 = vmul.f32 %v68, %v81
    %v84 = vmul.f32 %v72, %v81
    %v85 = vmul.f32 %v76, %v81
    %v86 = vadd.f32 %v58, %v82
    %v87 = vadd.f32 %v59, %v83
    %v88 = vadd.f32 %v60, %v84
    %v89 = vadd.f32 %v61, %v85
    %90 = vset.pattern.permute.xlu0 2
    %91 = vperm.xlu0 %90, %v30
    %v92 = vpop.permute.xlu0 %91
    %94 = vset.pattern.permute.xlu0 2
    %95 = vperm.xlu0 %94, %v31
    %v96 = vpop.permute.xlu0 %95
    %98 = vset.pattern.permute.xlu0 2
    %99 = vperm.xlu0 %98, %v32
    %v100 = vpop.permute.xlu0 %99
    %102 = vset.pattern.permute.xlu0 2
    %103 = vperm.xlu0 %102, %v33
    %v104 = vpop.permute.xlu0 %103
    %v106 = vlaneseq
    %v107 = vshrl.u32 %v106, 7
    %v108 = vsub.s32 2, %v107
    %v109 = vrot.slane %v29, %v108
    %v110 = vmul.f32 %v92, %v109
    %v111 = vmul.f32 %v96, %v109
    %v112 = vmul.f32 %v100, %v109
    %v113 = vmul.f32 %v104, %v109
    %v114 = vadd.f32 %v86, %v110
    %v115 = vadd.f32 %v87, %v111
    %v116 = vadd.f32 %v88, %v112
    %v117 = vadd.f32 %v89, %v113
    %118 = vset.pattern.permute.xlu0 3
    %119 = vperm.xlu0 %118, %v30
    %v120 = vpop.permute.xlu0 %119
    %122 = vset.pattern.permute.xlu0 3
    %123 = vperm.xlu0 %122, %v31
    %v124 = vpop.permute.xlu0 %123
    %126 = vset.pattern.permute.xlu0 3
    %127 = vperm.xlu0 %126, %v32
    %v128 = vpop.permute.xlu0 %127
    %130 = vset.pattern.permute.xlu0 3
    %131 = vperm.xlu0 %130, %v33
    %v132 = vpop.permute.xlu0 %131
    %v134 = vlaneseq
    %v135 = vshrl.u32 %v134, 7
    %v136 = vsub.s32 3, %v135
    %v137 = vrot.slane %v29, %v136
    %v138 = vmul.f32 %v120, %v137
    %v139 = vmul.f32 %v124, %v137
    %v140 = vmul.f32 %v128, %v137
    %v141 = vmul.f32 %v132, %v137
    %v142 = vadd.f32 %v114, %v138
    %v143 = vadd.f32 %v115, %v139
    %v144 = vadd.f32 %v116, %v140
    %v145 = vadd.f32 %v117, %v141
    %v146 = vld [vmem:[%s2] sm:$0xff]
    %v147 = vld [vmem:[%s2 + $0x8] sm:$0xff]
    %v148 = vld [vmem:[%s2 + $0x10] sm:$0xff]
    %v149 = vld [vmem:[%s2 + $0x18] sm:$0xff]
    %151 = vset.pattern.permute.xlu0 0
    %152 = vperm.xlu0 %151, %v146
    %v153 = vpop.permute.xlu0 %152
    %156 = vset.pattern.permute.xlu0 0
    %157 = vperm.xlu0 %156, %v147
    %v158 = vpop.permute.xlu0 %157
    %161 = vset.pattern.permute.xlu0 0
    %162 = vperm.xlu0 %161, %v148
    %v163 = vpop.permute.xlu0 %162
    %166 = vset.pattern.permute.xlu0 0
    %167 = vperm.xlu0 %166, %v149
    %v168 = vpop.permute.xlu0 %167
    %v170 = vadd.f32 %v142, %v153
    %v171 = vadd.f32 %v143, %v158
    %v172 = vadd.f32 %v144, %v163
    %v173 = vadd.f32 %v145, %v168
    %v174 = vtanh.pop %v170
    %v175 = vtanh.pop %v171
    %v176 = vtanh.pop %v172
    %v177 = vtanh.pop %v173
    %v178 = vld [vmem:[%s3] sm:$0xff]
    %v179 = vld [vmem:[%s3 + $0x8] sm:$0xff]
    %v180 = vld [vmem:[%s3 + $0x10] sm:$0xff]
    %v181 = vld [vmem:[%s3 + $0x18] sm:$0xff]
    %v182 = vld [vmem:[%s4] sm:$0xff]
    %v183 = vld [vmem:[%s4 + $0x8] sm:$0xff]
    %v184 = vld [vmem:[%s4 + $0x10] sm:$0xff]
    %v185 = vld [vmem:[%s4 + $0x18] sm:$0xff]
    %187 = vset.pattern.permute.xlu0 0
    %188 = vperm.xlu0 %187, %v182
    %v189 = vpop.permute.xlu0 %188
    %192 = vset.pattern.permute.xlu0 0
    %193 = vperm.xlu0 %192, %v183
    %v194 = vpop.permute.xlu0 %193
    %197 = vset.pattern.permute.xlu0 0
    %198 = vperm.xlu0 %197, %v184
    %v199 = vpop.permute.xlu0 %198
    %202 = vset.pattern.permute.xlu0 0
    %203 = vperm.xlu0 %202, %v185
    %v204 = vpop.permute.xlu0 %203
    %vm206 = vcmask 261120
    %v208 = vsel %vm206, %v178, 0
    %v211 = vsel %vm206, %v179, 0
    %v214 = vsel %vm206, %v180, 0
    %v217 = vsel %vm206, %v181, 0
    %219 = vmatprep.subr.mxu0 0.0
    %220 = vmatpush1.msra.mxu0 %v174
    %221 = vmatprep.subr.mxu0 0.0
    %222 = vmatpush1.msra.mxu0 %v175
    %223 = vmatprep.subr.mxu0 0.0
    %224 = vmatpush1.msra.mxu0 %v176
    %225 = vmatprep.subr.mxu0 0.0
    %226 = vmatpush1.msra.mxu0 %v177
    %227 = vmatprep.subr.mxu0 0.0
    %228 = vmatpush1.msra.mxu0 0.0
    %229 = vmatprep.subr.mxu0 0.0
    %230 = vmatpush1.msra.mxu0 0.0
    %231 = vmatprep.subr.mxu0 0.0
    %232 = vmatpush1.msra.mxu0 0.0
    %233 = vmatprep.subr.mxu0 0.0
    %234 = vmatpush1.msra.mxu0 0.0
    %235 = vmatprep.subr.mxu0 0.0
    %236 = vmatpush1.msra.mxu0 0.0
    %237 = vmatprep.subr.mxu0 0.0
    %238 = vmatpush1.msra.mxu0 0.0
    %239 = vmatprep.subr.mxu0 0.0
    %240 = vmatpush1.msra.mxu0 0.0
    %241 = vmatprep.subr.mxu0 0.0
    %242 = vmatpush1.msra.mxu0 0.0
    %243 = vmatprep.subr.mxu0 0.0
    %244 = vmatpush1.msra.mxu0 0.0
    %245 = vmatprep.subr.mxu0 0.0
    %246 = vmatpush1.msra.mxu0 0.0
    %247 = vmatprep.subr.mxu0 0.0
    %248 = vmatpush1.msra.mxu0 0.0
    %249 = vmatprep.subr.mxu0 0.0
    %250 = vmatpush1.msra.mxu0 0.0
    %251 = vmatprep.subr.mxu0 0.0
    %252 = vmatpush1.msra.mxu0 0.0
    %253 = vmatprep.subr.mxu0 0.0
    %254 = vmatpush1.msra.mxu0 0.0
    %255 = vmatprep.subr.mxu0 0.0
    %256 = vmatpush1.msra.mxu0 0.0
    %257 = vmatprep.subr.mxu0 0.0
    %258 = vmatpush1.msra.mxu0 0.0
    %259 = vmatprep.subr.mxu0 0.0
    %260 = vmatpush1.msra.mxu0 0.0
    %261 = vmatprep.subr.mxu0 0.0
    %262 = vmatpush1.msra.mxu0 0.0
    %263 = vmatprep.subr.mxu0 0.0
    %264 = vmatpush1.msra.mxu0 0.0
    %265 = vmatprep.subr.mxu0 0.0
    %266 = vmatpush1.msra.mxu0 0.0
    %267 = vmatprep.subr.mxu0 0.0
    %268 = vmatpush1.msra.mxu0 0.0
    %269 = vmatprep.subr.mxu0 0.0
    %270 = vmatpush1.msra.mxu0 0.0
    %271 = vmatprep.subr.mxu0 0.0
    %272 = vmatpush1.msra.mxu0 0.0
    %273 = vmatprep.subr.mxu0 0.0
    %274 = vmatpush1.msra.mxu0 0.0
    %275 = vmatprep.subr.mxu0 0.0
    %276 = vmatpush1.msra.mxu0 0.0
    %277 = vmatprep.subr.mxu0 0.0
    %278 = vmatpush1.msra.mxu0 0.0
    %279 = vmatprep.subr.mxu0 0.0
    %280 = vmatpush1.msra.mxu0 0.0
    %281 = vmatprep.subr.mxu0 0.0
    %282 = vmatpush1.msra.mxu0 0.0
    %283 = vmatprep.mubr.f32.mxu0 0.0
    %284 = vmatmul.mubr.f32.gmra.mrb[0].mxu0 %v208
    %v285 = vpop.f32.mrb[0].mxu0
    %v286 = vadd.f32 %v189, %v285
    %v287 = vpop.f32.mrb[0].mxu0
    %288 = vmatprep.mubr.f32.mxu0 0.0
    %289 = vmatmul.mubr.f32.gmra.mrb[0].mxu0 %v211
    %v290 = vpop.f32.mrb[0].mxu0
    %v291 = vadd.f32 %v194, %v290
    %v292 = vpop.f32.mrb[0].mxu0
    %293 = vmatprep.mubr.f32.mxu0 0.0
    %294 = vmatmul.mubr.f32.gmra.mrb[0].mxu0 %v214
    %v295 = vpop.f32.mrb[0].mxu0
    %v296 = vadd.f32 %v199, %v295
    %v297 = vpop.f32.mrb[0].mxu0
    %298 = vmatprep.mubr.f32.mxu0 0.0
    %299 = vmatmul.mubr.f32.gmra.mrb[0].mxu0 %v217
    %v300 = vpop.f32.mrb[0].mxu0
    %v301 = vadd.f32 %v204, %v300
    %v302 = vpop.f32.mrb[0].mxu0
    %303 = vdwg.mxu0
    %v304 = vtanh.pop %v286
    %v305 = vtanh.pop %v291
    %v306 = vtanh.pop %v296
    %v307 = vtanh.pop %v301
    %v308 = vld [vmem:[%s5] sm:$0x1]
    %v309 = vld [vmem:[#allocation2] sm:$0x1]
    %311 = vset.pattern.permute.xlu0 0
    %312 = vperm.xlu0 %311, %v309
    %v313 = vpop.permute.xlu0 %312
    %v315 = vlaneseq
    %v316 = vshrl.u32 %v315, 7
    %v317 = vsub.s32 0, %v316
    %v318 = vrot.slane %v313, %v317
    %v320 = vsel %vm206, %v308, 0
    %322 = vmatprep.subr.mxu0 0.0
    %323 = vmatpush1.msra.mxu0 %v304
    %324 = vmatprep.subr.mxu0 0.0
    %325 = vmatpush1.msra.mxu0 %v305
    %326 = vmatprep.subr.mxu0 0.0
    %327 = vmatpush1.msra.mxu0 %v306
    %328 = vmatprep.subr.mxu0 0.0
    %329 = vmatpush1.msra.mxu0 %v307
    %330 = vmatprep.subr.mxu0 0.0
    %331 = vmatpush1.msra.mxu0 0.0
    %332 = vmatprep.subr.mxu0 0.0
    %333 = vmatpush1.msra.mxu0 0.0
    %334 = vmatprep.subr.mxu0 0.0
    %335 = vmatpush1.msra.mxu0 0.0
    %336 = vmatprep.subr.mxu0 0.0
    %337 = vmatpush1.msra.mxu0 0.0
    %338 = vmatprep.subr.mxu0 0.0
    %339 = vmatpush1.msra.mxu0 0.0
    %340 = vmatprep.subr.mxu0 0.0
    %341 = vmatpush1.msra.mxu0 0.0
    %342 = vmatprep.subr.mxu0 0.0
    %343 = vmatpush1.msra.mxu0 0.0
    %344 = vmatprep.subr.mxu0 0.0
    %345 = vmatpush1.msra.mxu0 0.0
    %346 = vmatprep.subr.mxu0 0.0
    %347 = vmatpush1.msra.mxu0 0.0
    %348 = vmatprep.subr.mxu0 0.0
    %349 = vmatpush1.msra.mxu0 0.0
    %350 = vmatprep.subr.mxu0 0.0
    %351 = vmatpush1.msra.mxu0 0.0
    %352 = vmatprep.subr.mxu0 0.0
    %353 = vmatpush1.msra.mxu0 0.0
    %354 = vmatprep.subr.mxu0 0.0
    %355 = vmatpush1.msra.mxu0 0.0
    %356 = vmatprep.subr.mxu0 0.0
    %357 = vmatpush1.msra.mxu0 0.0
    %358 = vmatprep.subr.mxu0 0.0
    %359 = vmatpush1.msra.mxu0 0.0
    %360 = vmatprep.subr.mxu0 0.0
    %361 = vmatpush1.msra.mxu0 0.0
    %362 = vmatprep.subr.mxu0 0.0
    %363 = vmatpush1.msra.mxu0 0.0
    %364 = vmatprep.subr.mxu0 0.0
    %365 = vmatpush1.msra.mxu0 0.0
    %366 = vmatprep.subr.mxu0 0.0
    %367 = vmatpush1.msra.mxu0 0.0
    %368 = vmatprep.subr.mxu0 0.0
    %369 = vmatpush1.msra.mxu0 0.0
    %370 = vmatprep.subr.mxu0 0.0
    %371 = vmatpush1.msra.mxu0 0.0
    %372 = vmatprep.subr.mxu0 0.0
    %373 = vmatpush1.msra.mxu0 0.0
    %374 = vmatprep.subr.mxu0 0.0
    %375 = vmatpush1.msra.mxu0 0.0
    %376 = vmatprep.subr.mxu0 0.0
    %377 = vmatpush1.msra.mxu0 0.0
    %378 = vmatprep.subr.mxu0 0.0
    %379 = vmatpush1.msra.mxu0 0.0
    %380 = vmatprep.subr.mxu0 0.0
    %381 = vmatpush1.msra.mxu0 0.0
    %382 = vmatprep.subr.mxu0 0.0
    %383 = vmatpush1.msra.mxu0 0.0
    %384 = vmatprep.subr.mxu0 0.0
    %385 = vmatpush1.msra.mxu0 0.0
    %386 = vmatprep.mubr.f32.mxu0 0.0
    %387 = vmatmul.mubr.f32.gmra.mrb[0].mxu0 %v320
    %v388 = vpop.f32.mrb[0].mxu0
    %v389 = vadd.f32 %v318, %v388
    %v390 = vpop.f32.mrb[0].mxu0
    %391 = vdwg.mxu0
    %vm392 = vcmp.gt.f32.partialorder %v389, 20.0
    %v393 = vsel %vm392, 0.0, %v389
    %v394 = vmul.f32 %v393, 1.442695
    %v395 = vpow.pop %v394
    %v396 = vadd.f32 %v395, 1.0
    %v397 = vlog2.pop %v396
    %v398 = vmul.f32 %v397, 0.6931472
    %v399 = vmul.f32 -0.5, %v395
    %v400 = vadd.f32 %v399, 1.0
    %v401 = vmul.f32 %v400, %v395
    %v402 = vand.u32 2147483647, %v395
    %vm403 = vcmp.lt.f32.partialorder %v402, 0.0004427343
    %v404 = vsel %vm403, %v401, %v398
    %v405 = vsel %vm392, %v389, %v404
    %vm406 = vcmask 57344
    %407 = vst.msk [vmem:[#allocation3] sm:$0x1] %vm406, %v405
    // Predicated region
    $region30: #{tpu_custom_call.1} parent=1 // pred_check
      _
    $region31: #{tpu_custom_call.1} parent=1 // pred_check_branch
      %409 = sbr.rel (0) target = $region33
    $region32: #{tpu_custom_call.1} parent=1 // pred_region
      %s411 = ssub.s32 16, 16
      %412 = vsyncadd [#allocation4], %s411
      %s414 = sshll.u32 [#allocation3], 4
      %s415 = int_to_ptr.vmem [resolvable:$true] %s414
      %417 = dma.vmem_to_hbm [thread:$0]  %s415, 16, %s7, [#allocation4]
    $region33: #{tpu_custom_call.1} parent=1 // pred_fallthru
      _
    // Predicated region
    $region34: #{tpu_custom_call.1} parent=1 // pred_check
      _
    $region35: #{tpu_custom_call.1} parent=1 // pred_check_branch
      %419 = sbr.rel (0) target = $region37
    $region36: #{tpu_custom_call.1} parent=1 // pred_region
      %420 = dma.done [#allocation4], 16
    $region37: #{tpu_custom_call.1} parent=1 // pred_fallthru
      _
    %421 = vsyncpa [#allocation4], 1

</llo_original>
